<compile_context>
chip_gen: v5e
topology: v5e:2x2
jax: 0.10.0
libtpu: 0.0.40
codegen_flags: <defaults>
</compile_context>

<pallas_src>
import functools

import jax
import jax.numpy as jnp
import numpy as np
from jax.experimental import pallas as pl
from jax.experimental.pallas import tpu as pltpu

# GraphActionType constants (as in torchgfn)
ACTION_ADD_NODE = 0
ACTION_ADD_EDGE = 1
ACTION_EXIT = 2

LN_EPS = 1e-5  # torch.nn.LayerNorm default


def _round_up(x, m):
    return ((x + m - 1) // m) * m


# --------------------------------------------------------------------------
# Kernel
# --------------------------------------------------------------------------
def _ln(h, g, b):
    mu = jnp.mean(h, axis=-1, keepdims=True)
    var = jnp.mean(jnp.square(h - mu), axis=-1, keepdims=True)
    return (h - mu) * jax.lax.rsqrt(var + LN_EPS) * g + b


def graph_edge_action_mlp_kernel(x_ref, w1_ref, w2_ref, w3_ref, wh_ref, wo_ref,
                                 vm_ref, vh_ref, bo_ref, out_ref, *, E):
    """One (TB, n^2) batch tile -> one (TB, OUT_PAD) lane-dense output tile.

    vm_ref: (8, E)  rows = [b1, g1, be1, b2, g2, be2, b3, pad]   (main MLP)
    vh_ref: (4, 3E) rows = [b_heads, gamma_heads, beta_heads, pad]
    wo_ref: (3E, OUT_PAD) block-diagonal fused final weights of the 3 heads.
    bo_ref: (1, OUT_PAD)  fused final biases (zero in pad columns).
    """
    bf16 = jnp.bfloat16
    f32 = jnp.float32

    vm = vm_ref[...]                       # (8, E)  f32
    vh = vh_ref[...]                       # (4, 3E) f32
    b1, g1, be1 = vm[0:1], vm[1:2], vm[2:3]
    b2, g2, be2 = vm[3:4], vm[4:5], vm[5:6]
    b3 = vm[6:7]
    bh, gh, beh = vh[0:1], vh[1:2], vh[2:3]

    x = x_ref[...]                         # (TB, n^2) bf16

    # ---- main MLP: Lin + LN + ReLU, Lin + LN + ReLU, last Lin
    h = jnp.dot(x, w1_ref[...], preferred_element_type=f32) + b1
    h = jnp.maximum(_ln(h, g1, be1), 0.0)
    h = jnp.dot(h.astype(bf16), w2_ref[...], preferred_element_type=f32) + b2
    h = jnp.maximum(_ln(h, g2, be2), 0.0)
    emb = jnp.dot(h.astype(bf16), w3_ref[...], preferred_element_type=f32) + b3

    # ---- fused head hidden layer: one (TB,E)@(E,3E) matmul for all 3 heads
    hh = jnp.dot(emb.astype(bf16), wh_ref[...], preferred_element_type=f32) + bh

    # per-head LayerNorm (reduction scope stays E-wide) + ReLU
    parts = []
    for k in range(3):
        sl = slice(k * E, (k + 1) * E)
        parts.append(jnp.maximum(_ln(hh[:, sl], gh[:, sl], beh[:, sl]), 0.0))
    hcat = jnp.concatenate(parts, axis=-1).astype(bf16)   # (TB, 3E)

    # ---- fused block-diagonal final Linear of all 3 heads, single dense store
    out_ref[...] = (jnp.dot(hcat, wo_ref[...], preferred_element_type=f32)
                    + bo_ref[...])


# --------------------------------------------------------------------------
# Wrapper
# --------------------------------------------------------------------------
@functools.partial(jax.jit, static_argnames=("embedding_dim", "edges_dim",
                                             "num_edge_classes", "tile_b"))
def graph_edge_action_mlp(adj_flat, packed, *, embedding_dim, edges_dim,
                          num_edge_classes, tile_b=512):
    """adj_flat: (B, n_nodes**2) flattened adjacency matrices (any float dtype)."""
    B, n2 = adj_flat.shape
    E = embedding_dim
    total_out = edges_dim + 1 + num_edge_classes
    out_pad = _round_up(total_out, 128)          # lane-dense output slab width

    # Batch tile: multiple of 8, at most tile_b (<=512 keeps v7x 64MiB VMEM happy)
    TB = min(tile_b, _round_up(B, 8))
    TB = _round_up(TB, 8)
    Bp = _round_up(B, TB)

    xp = adj_flat.astype(jnp.bfloat16)           # 0/1 values: exact in bf16
    if Bp != B:
        xp = jnp.pad(xp, ((0, Bp - B), (0, 0)))

    W1, W2, W3, Wh, Wo, vm, vh, bo = packed

    resident = lambda i: (0, 0)                  # weights stay in VMEM across grid
    in_specs = [
        pl.BlockSpec((TB, n2), lambda i: (i, 0)),        # streamed input tile
        pl.BlockSpec(W1.shape, resident),
        pl.BlockSpec(W2.shape, resident),
        pl.BlockSpec(W3.shape, resident),
        pl.BlockSpec(Wh.shape, resident),
        pl.BlockSpec(Wo.shape, resident),
        pl.BlockSpec(vm.shape, resident),
        pl.BlockSpec(vh.shape, resident),
        pl.BlockSpec(bo.shape, resident),
    ]
    out_spec = pl.BlockSpec((TB, out_pad), lambda i: (i, 0))

    flops = 2 * Bp * (n2 * E + 2 * E * E + E * 3 * E + 3 * E * out_pad)
    bytes_accessed = (Bp * n2 * 2 + Bp * out_pad * 4
                      + 2 * int(W1.size + W2.size + W3.size + Wh.size + Wo.size)
                      + 4 * int(vm.size + vh.size + bo.size))
    cost = pl.CostEstimate(flops=int(flops),
                           transcendentals=int(5 * Bp),
                           bytes_accessed=int(bytes_accessed))

    out = pl.pallas_call(
        functools.partial(graph_edge_action_mlp_kernel, E=E),
        out_shape=jax.ShapeDtypeStruct((Bp, out_pad), jnp.float32),
        grid=(Bp // TB,),
        in_specs=in_specs,
        out_specs=out_spec,
        compiler_params=pltpu.CompilerParams(
            dimension_semantics=("parallel",),
            vmem_limit_bytes=48 * 1024 * 1024),
        cost_estimate=cost,
    )(xp, W1, W2, W3, Wh, Wo, vm, vh, bo)

    # Slice the lane-dense slab back apart (glue, not hot path).
    edge_logits = out[:B, :edges_dim]
    exit_logit = out[:B, edges_dim:edges_dim + 1]
    edge_class_logits = out[:B, edges_dim + 1:edges_dim + 1 + num_edge_classes]

    action_type = jnp.full((B, 3), -jnp.inf, dtype=jnp.float32)
    action_type = action_type.at[:, ACTION_ADD_EDGE].set(0.0)
    action_type = action_type.at[:, ACTION_EXIT].set(exit_logit[:, 0])
    node_class = jnp.zeros((B, 1), dtype=jnp.float32)

    return {
        "action_type": action_type,
        "node_class": node_class,
        "edge_class": edge_class_logits,
        "edge_index": edge_logits,
    }


# --------------------------------------------------------------------------
# Parameter init (mirrors the torch module shapes/init) + packing
# --------------------------------------------------------------------------
def init_raw_params(key, n_nodes, embedding_dim, edges_dim, num_edge_classes):
    E = embedding_dim
    in_dim = n_nodes * n_nodes

    def lin(key, fan_in, fan_out):
        kw, kb = jax.random.split(key)
        bound = 1.0 / np.sqrt(fan_in)
        w = jax.random.uniform(kw, (fan_in, fan_out), jnp.float32, -bound, bound)
        b = jax.random.uniform(kb, (1, fan_out), jnp.float32, -bound, bound)
        return w, b

    def ln(dim):
        return jnp.ones((1, dim), jnp.float32), jnp.zeros((1, dim), jnp.float32)

    keys = jax.random.split(key, 16)
    raw = []
    # main MLP: Lin(in,E)+LN, Lin(E,E)+LN, last Lin(E,E)
    w1, b1 = lin(keys[0], in_dim, E); g1, be1 = ln(E)
    w2, b2 = lin(keys[1], E, E);      g2, be2 = ln(E)
    w3, b3 = lin(keys[2], E, E)
    raw += [w1, b1, g1, be1, w2, b2, g2, be2, w3, b3]
    # edge MLP: Lin(E,E)+LN, last Lin(E, edges_dim)
    ew, eb = lin(keys[3], E, E); eg, ebe = ln(E)
    ewo, ebo = lin(keys[4], E, edges_dim)
    raw += [ew, eb, eg, ebe, ewo, ebo]
    # exit MLP: Lin(E,E)+LN, last Lin(E, 1)
    xw, xb = lin(keys[5], E, E); xg, xbe = ln(E)
    xwo, xbo = lin(keys[6], E, 1)
    raw += [xw, xb, xg, xbe, xwo, xbo]
    # edge-class MLP: Lin(E,E)+LN, last Lin(E, num_edge_classes)
    cw, cb = lin(keys[7], E, E); cg, cbe = ln(E)
    cwo, cbo = lin(keys[8], E, num_edge_classes)
    raw += [cw, cb, cg, cbe, cwo, cbo]
    return raw


def pack_params(raw, embedding_dim, edges_dim, num_edge_classes):
    """Fuse/pack raw per-layer params into the 8 kernel inputs."""
    E = embedding_dim
    total_out = edges_dim + 1 + num_edge_classes
    out_pad = _round_up(total_out, 128)
    bf = jnp.bfloat16

    (w1, b1, g1, be1, w2, b2, g2, be2, w3, b3,
     ew, eb, eg, ebe, ewo, ebo,
     xw, xb, xg, xbe, xwo, xbo,
     cw, cb, cg, cbe, cwo, cbo) = raw

    W1, W2, W3 = w1.astype(bf), w2.astype(bf), w3.astype(bf)
    # fused head hidden weights (E, 3E)
    Wh = jnp.concatenate([ew, xw, cw], axis=1).astype(bf)
    # block-diagonal fused head output weights (3E, OUT_PAD)
    Wo = jnp.zeros((3 * E, out_pad), jnp.float32)
    Wo = Wo.at[0:E, 0:edges_dim].set(ewo)
    Wo = Wo.at[E:2 * E, edges_dim:edges_dim + 1].set(xwo)
    Wo = Wo.at[2 * E:3 * E,
               edges_dim + 1:edges_dim + 1 + num_edge_classes].set(cwo)
    Wo = Wo.astype(bf)

    vm = jnp.concatenate([b1, g1, be1, b2, g2, be2, b3,
                          jnp.zeros((1, E), jnp.float32)], axis=0)        # (8, E)
    vh = jnp.concatenate([
        jnp.concatenate([eb, xb, cb], axis=1),
        jnp.concatenate([eg, xg, cg], axis=1),
        jnp.concatenate([ebe, xbe, cbe], axis=1),
        jnp.zeros((1, 3 * E), jnp.float32)], axis=0)                      # (4, 3E)
    bo = jnp.zeros((1, out_pad), jnp.float32)
    bo = bo.at[:, 0:edges_dim].set(ebo)
    bo = bo.at[:, edges_dim:edges_dim + 1].set(xbo)
    bo = bo.at[:, edges_dim + 1:edges_dim + 1 + num_edge_classes].set(cbo)

    return (W1, W2, W3, Wh, Wo, vm, vh, bo)


# --------------------------------------------------------------------------
# Pure-JAX reference (same math, same bf16 matmul casts) for correctness
# --------------------------------------------------------------------------
def reference(adj_flat, raw):
    (w1, b1, g1, be1, w2, b2, g2, be2, w3, b3,
     ew, eb, eg, ebe, ewo, ebo,
     xw, xb, xg, xbe, xwo, xbo,
     cw, cb, cg, cbe, cwo, cbo) = raw
    bf = jnp.bfloat16

    def dot(a, w):
        return jnp.dot(a.astype(bf), w.astype(bf),
                       preferred_element_type=jnp.float32)

    def ln(h, g, b):
        mu = jnp.mean(h, axis=-1, keepdims=True)
        var = jnp.mean(jnp.square(h - mu), axis=-1, keepdims=True)
        return (h - mu) / jnp.sqrt(var + LN_EPS) * g + b

    x = adj_flat.astype(jnp.float32)
    h = jnp.maximum(ln(dot(x, w1) + b1, g1, be1), 0)
    h = jnp.maximum(ln(dot(h, w2) + b2, g2, be2), 0)
    emb = dot(h, w3) + b3
    edge = dot(jnp.maximum(ln(dot(emb, ew) + eb, eg, ebe), 0), ewo) + ebo
    exit_l = dot(jnp.maximum(ln(dot(emb, xw) + xb, xg, xbe), 0), xwo) + xbo
    cls = dot(jnp.maximum(ln(dot(emb, cw) + cb, cg, cbe), 0), cwo) + cbo
    return edge, exit_l, cls


def _run_and_check(key, *, B, n_nodes, embedding_dim, num_edge_classes,
                   directed=True, tile_b=512):
    edges_dim = n_nodes * n_nodes - n_nodes
    if not directed:
        edges_dim //= 2

    kparams, kedges = jax.random.split(key)
    raw = init_raw_params(kparams, n_nodes, embedding_dim, edges_dim,
                          num_edge_classes)
    packed = pack_params(raw, embedding_dim, edges_dim, num_edge_classes)

    # Build adjacency matrices (plain-JAX glue, mirrors the torch scatter).
    # TODO(synk): GeometricBatch / per-graph edge_index extraction has no Pallas
    # equivalent; adjacency construction is done here in plain JAX.
    n_edges = max(1, n_nodes)
    src = jax.random.randint(kedges, (B, n_edges), 0, n_nodes)
    dst = jax.random.randint(jax.random.fold_in(kedges, 1), (B, n_edges), 0, n_nodes)
    adj = jnp.zeros((B, n_nodes, n_nodes), dtype=jnp.float32)
    bidx = jnp.repeat(jnp.arange(B), n_edges)
    adj = adj.at[bidx, src.reshape(-1), dst.reshape(-1)].set(1.0)
    adj_flat = adj.reshape(B, n_nodes * n_nodes)

    out = graph_edge_action_mlp(
        adj_flat, packed, embedding_dim=embedding_dim, edges_dim=edges_dim,
        num_edge_classes=num_edge_classes, tile_b=tile_b)
    out = jax.block_until_ready(out)

    ref_edge, ref_exit, ref_cls = reference(adj_flat, raw)
    np.testing.assert_allclose(np.asarray(out["edge_index"]), np.asarray(ref_edge),
                               rtol=5e-3, atol=5e-3)
    np.testing.assert_allclose(np.asarray(out["edge_class"]), np.asarray(ref_cls),
                               rtol=5e-3, atol=5e-3)
    np.testing.assert_allclose(np.asarray(out["action_type"][:, ACTION_EXIT]),
                               np.asarray(ref_exit[:, 0]), rtol=5e-3, atol=5e-3)
    assert np.all(np.isneginf(np.asarray(out["action_type"][:, ACTION_ADD_NODE])))
    assert np.all(np.asarray(out["action_type"][:, ACTION_ADD_EDGE]) == 0.0)
    assert out["node_class"].shape == (B, 1)


# --------------------------------------------------------------------------
if __name__ == "__main__":
    key = jax.random.PRNGKey(0)
    k1, k2 = jax.random.split(key)

    # Small config matching the module defaults-ish (single tile, padded batch).
    _run_and_check(k1, B=2, n_nodes=4, embedding_dim=32, num_edge_classes=3)

    # Larger config exercising multi-tile grid, batch padding and megacore path.
    _run_and_check(k2, B=600, n_nodes=8, embedding_dim=64, num_edge_classes=5,
                   tile_b=256)

    print("KERNEL_OK")
</pallas_src>

<mosaic_0001>
module attributes {stable_mosaic.version = 11 : i64} {
  func.func @graph_edge_action_mlp_kernel(%arg0: i32, %arg1: memref<8x16xbf16, #tpu.memory_space<vmem>>, %arg2: memref<16x32xbf16, #tpu.memory_space<vmem>>, %arg3: memref<32x32xbf16, #tpu.memory_space<vmem>>, %arg4: memref<32x32xbf16, #tpu.memory_space<vmem>>, %arg5: memref<32x96xbf16, #tpu.memory_space<vmem>>, %arg6: memref<96x128xbf16, #tpu.memory_space<vmem>>, %arg7: memref<8x32xf32, #tpu.memory_space<vmem>>, %arg8: memref<4x96xf32, #tpu.memory_space<vmem>>, %arg9: memref<1x128xf32, #tpu.memory_space<vmem>>, %arg10: memref<8x128xf32, #tpu.memory_space<vmem>>) attributes {dimension_semantics = [#tpu.dimension_semantics<parallel>], iteration_bounds = array<i64: 1>, scalar_prefetch = 0 : i64, scratch_operands = 0 : i64, tpu.core_type = #tpu.core_type<tc>, window_params = [{transform_indices = @transform_0, window_bounds = array<i64: 8, 16>}, {pipeline_mode = #tpu.pipeline_mode<synchronous>, transform_indices = @transform_1, window_bounds = array<i64: 16, 32>}, {pipeline_mode = #tpu.pipeline_mode<synchronous>, transform_indices = @transform_2, window_bounds = array<i64: 32, 32>}, {pipeline_mode = #tpu.pipeline_mode<synchronous>, transform_indices = @transform_3, window_bounds = array<i64: 32, 32>}, {pipeline_mode = #tpu.pipeline_mode<synchronous>, transform_indices = @transform_4, window_bounds = array<i64: 32, 96>}, {pipeline_mode = #tpu.pipeline_mode<synchronous>, transform_indices = @transform_5, window_bounds = array<i64: 96, 128>}, {pipeline_mode = #tpu.pipeline_mode<synchronous>, transform_indices = @transform_6, window_bounds = array<i64: 8, 32>}, {pipeline_mode = #tpu.pipeline_mode<synchronous>, transform_indices = @transform_7, window_bounds = array<i64: 4, 96>}, {pipeline_mode = #tpu.pipeline_mode<synchronous>, transform_indices = @transform_8, window_bounds = array<i64: 1, 128>}, {transform_indices = @transform_9, window_bounds = array<i64: 8, 128>}]} {
    %c0 = arith.constant 0 : index
    %c0_0 = arith.constant 0 : index
    %0 = vector.load %arg7[%c0, %c0_0] : memref<8x32xf32, #tpu.memory_space<vmem>>, vector<8x32xf32>
    %c0_1 = arith.constant 0 : index
    %c0_2 = arith.constant 0 : index
    %1 = vector.load %arg8[%c0_1, %c0_2] : memref<4x96xf32, #tpu.memory_space<vmem>>, vector<4x96xf32>
    %2 = vector.extract_strided_slice %0 {offsets = [0, 0], sizes = [1, 32], strides = [1, 1]} : vector<8x32xf32> to vector<1x32xf32>
    %3 = vector.extract_strided_slice %0 {offsets = [1, 0], sizes = [1, 32], strides = [1, 1]} : vector<8x32xf32> to vector<1x32xf32>
    %4 = vector.extract_strided_slice %0 {offsets = [2, 0], sizes = [1, 32], strides = [1, 1]} : vector<8x32xf32> to vector<1x32xf32>
    %5 = vector.extract_strided_slice %0 {offsets = [3, 0], sizes = [1, 32], strides = [1, 1]} : vector<8x32xf32> to vector<1x32xf32>
    %6 = vector.extract_strided_slice %0 {offsets = [4, 0], sizes = [1, 32], strides = [1, 1]} : vector<8x32xf32> to vector<1x32xf32>
    %7 = vector.extract_strided_slice %0 {offsets = [5, 0], sizes = [1, 32], strides = [1, 1]} : vector<8x32xf32> to vector<1x32xf32>
    %8 = vector.extract_strided_slice %0 {offsets = [6, 0], sizes = [1, 32], strides = [1, 1]} : vector<8x32xf32> to vector<1x32xf32>
    %9 = vector.extract_strided_slice %1 {offsets = [0, 0], sizes = [1, 96], strides = [1, 1]} : vector<4x96xf32> to vector<1x96xf32>
    %10 = vector.extract_strided_slice %1 {offsets = [1, 0], sizes = [1, 96], strides = [1, 1]} : vector<4x96xf32> to vector<1x96xf32>
    %11 = vector.extract_strided_slice %1 {offsets = [2, 0], sizes = [1, 96], strides = [1, 1]} : vector<4x96xf32> to vector<1x96xf32>
    %c0_3 = arith.constant 0 : index
    %c0_4 = arith.constant 0 : index
    %12 = vector.load %arg1[%c0_3, %c0_4] : memref<8x16xbf16, #tpu.memory_space<vmem>>, vector<8x16xbf16>
    %c0_5 = arith.constant 0 : index
    %c0_6 = arith.constant 0 : index
    %13 = vector.load %arg2[%c0_5, %c0_6] : memref<16x32xbf16, #tpu.memory_space<vmem>>, vector<16x32xbf16>
    %cst = arith.constant dense<0.000000e+00> : vector<8x32xf32>
    %14 = tpu.matmul %12, %13, %cst {dimension_numbers = #tpu.dot_dimension_numbers<[1], [0], [0], [1], [0, 0, 1, 1], [], []>} : vector<8x16xbf16>, vector<16x32xbf16>, vector<8x32xf32> -> vector<8x32xf32>
    %15 = vector.broadcast %2 : vector<1x32xf32> to vector<8x32xf32>
    %16 = arith.addf %14, %15 : vector<8x32xf32>
    %cst_7 = arith.constant dense<0.000000e+00> : vector<8xf32>
    %17 = vector.multi_reduction <add>, %16, %cst_7 [1] : vector<8x32xf32> to vector<8xf32>
    %18 = vector.shape_cast %17 : vector<8xf32> to vector<8x1xf32>
    %cst_8 = arith.constant 3.200000e+01 : f32
    %19 = vector.broadcast %cst_8 : f32 to vector<8x1xf32>
    %20 = arith.divf %18, %19 : vector<8x1xf32>
    %21 = vector.broadcast %20 : vector<8x1xf32> to vector<8x32xf32>
    %22 = arith.subf %16, %21 : vector<8x32xf32>
    %23 = arith.mulf %22, %22 : vector<8x32xf32>
    %cst_9 = arith.constant dense<0.000000e+00> : vector<8xf32>
    %24 = vector.multi_reduction <add>, %23, %cst_9 [1] : vector<8x32xf32> to vector<8xf32>
    %25 = vector.shape_cast %24 : vector<8xf32> to vector<8x1xf32>
    %cst_10 = arith.constant 3.200000e+01 : f32
    %26 = vector.broadcast %cst_10 : f32 to vector<8x1xf32>
    %27 = arith.divf %25, %26 : vector<8x1xf32>
    %28 = vector.broadcast %20 : vector<8x1xf32> to vector<8x32xf32>
    %29 = arith.subf %16, %28 : vector<8x32xf32>
    %cst_11 = arith.constant 9.99999974E-6 : f32
    %30 = vector.broadcast %cst_11 : f32 to vector<8x1xf32>
    %31 = arith.addf %27, %30 : vector<8x1xf32>
    %32 = math.rsqrt %31 : vector<8x1xf32>
    %33 = vector.broadcast %32 : vector<8x1xf32> to vector<8x32xf32>
    %34 = arith.mulf %29, %33 : vector<8x32xf32>
    %35 = vector.broadcast %3 : vector<1x32xf32> to vector<8x32xf32>
    %36 = arith.mulf %34, %35 : vector<8x32xf32>
    %37 = vector.broadcast %4 : vector<1x32xf32> to vector<8x32xf32>
    %38 = arith.addf %36, %37 : vector<8x32xf32>
    %cst_12 = arith.constant 0.000000e+00 : f32
    %39 = vector.broadcast %cst_12 : f32 to vector<8x32xf32>
    %40 = arith.maximumf %38, %39 : vector<8x32xf32>
    %41 = arith.truncf %40 : vector<8x32xf32> to vector<8x32xbf16>
    %c0_13 = arith.constant 0 : index
    %c0_14 = arith.constant 0 : index
    %42 = vector.load %arg3[%c0_13, %c0_14] : memref<32x32xbf16, #tpu.memory_space<vmem>>, vector<32x32xbf16>
    %cst_15 = arith.constant dense<0.000000e+00> : vector<8x32xf32>
    %43 = tpu.matmul %41, %42, %cst_15 {dimension_numbers = #tpu.dot_dimension_numbers<[1], [0], [0], [1], [0, 0, 1, 1], [], []>} : vector<8x32xbf16>, vector<32x32xbf16>, vector<8x32xf32> -> vector<8x32xf32>
    %44 = vector.broadcast %5 : vector<1x32xf32> to vector<8x32xf32>
    %45 = arith.addf %43, %44 : vector<8x32xf32>
    %cst_16 = arith.constant dense<0.000000e+00> : vector<8xf32>
    %46 = vector.multi_reduction <add>, %45, %cst_16 [1] : vector<8x32xf32> to vector<8xf32>
    %47 = vector.shape_cast %46 : vector<8xf32> to vector<8x1xf32>
    %cst_17 = arith.constant 3.200000e+01 : f32
    %48 = vector.broadcast %cst_17 : f32 to vector<8x1xf32>
    %49 = arith.divf %47, %48 : vector<8x1xf32>
    %50 = vector.broadcast %49 : vector<8x1xf32> to vector<8x32xf32>
    %51 = arith.subf %45, %50 : vector<8x32xf32>
    %52 = arith.mulf %51, %51 : vector<8x32xf32>
    %cst_18 = arith.constant dense<0.000000e+00> : vector<8xf32>
    %53 = vector.multi_reduction <add>, %52, %cst_18 [1] : vector<8x32xf32> to vector<8xf32>
    %54 = vector.shape_cast %53 : vector<8xf32> to vector<8x1xf32>
    %cst_19 = arith.constant 3.200000e+01 : f32
    %55 = vector.broadcast %cst_19 : f32 to vector<8x1xf32>
    %56 = arith.divf %54, %55 : vector<8x1xf32>
    %57 = vector.broadcast %49 : vector<8x1xf32> to vector<8x32xf32>
    %58 = arith.subf %45, %57 : vector<8x32xf32>
    %cst_20 = arith.constant 9.99999974E-6 : f32
    %59 = vector.broadcast %cst_20 : f32 to vector<8x1xf32>
    %60 = arith.addf %56, %59 : vector<8x1xf32>
    %61 = math.rsqrt %60 : vector<8x1xf32>
    %62 = vector.broadcast %61 : vector<8x1xf32> to vector<8x32xf32>
    %63 = arith.mulf %58, %62 : vector<8x32xf32>
    %64 = vector.broadcast %6 : vector<1x32xf32> to vector<8x32xf32>
    %65 = arith.mulf %63, %64 : vector<8x32xf32>
    %66 = vector.broadcast %7 : vector<1x32xf32> to vector<8x32xf32>
    %67 = arith.addf %65, %66 : vector<8x32xf32>
    %cst_21 = arith.constant 0.000000e+00 : f32
    %68 = vector.broadcast %cst_21 : f32 to vector<8x32xf32>
    %69 = arith.maximumf %67, %68 : vector<8x32xf32>
    %70 = arith.truncf %69 : vector<8x32xf32> to vector<8x32xbf16>
    %c0_22 = arith.constant 0 : index
    %c0_23 = arith.constant 0 : index
    %71 = vector.load %arg4[%c0_22, %c0_23] : memref<32x32xbf16, #tpu.memory_space<vmem>>, vector<32x32xbf16>
    %cst_24 = arith.constant dense<0.000000e+00> : vector<8x32xf32>
    %72 = tpu.matmul %70, %71, %cst_24 {dimension_numbers = #tpu.dot_dimension_numbers<[1], [0], [0], [1], [0, 0, 1, 1], [], []>} : vector<8x32xbf16>, vector<32x32xbf16>, vector<8x32xf32> -> vector<8x32xf32>
    %73 = vector.broadcast %8 : vector<1x32xf32> to vector<8x32xf32>
    %74 = arith.addf %72, %73 : vector<8x32xf32>
    %75 = arith.truncf %74 : vector<8x32xf32> to vector<8x32xbf16>
    %c0_25 = arith.constant 0 : index
    %c0_26 = arith.constant 0 : index
    %76 = vector.load %arg5[%c0_25, %c0_26] : memref<32x96xbf16, #tpu.memory_space<vmem>>, vector<32x96xbf16>
    %cst_27 = arith.constant dense<0.000000e+00> : vector<8x96xf32>
    %77 = tpu.matmul %75, %76, %cst_27 {dimension_numbers = #tpu.dot_dimension_numbers<[1], [0], [0], [1], [0, 0, 1, 1], [], []>} : vector<8x32xbf16>, vector<32x96xbf16>, vector<8x96xf32> -> vector<8x96xf32>
    %78 = vector.broadcast %9 : vector<1x96xf32> to vector<8x96xf32>
    %79 = arith.addf %77, %78 : vector<8x96xf32>
    %80 = vector.extract_strided_slice %79 {offsets = [0, 0], sizes = [8, 32], strides = [1, 1]} : vector<8x96xf32> to vector<8x32xf32>
    %81 = vector.extract_strided_slice %10 {offsets = [0, 0], sizes = [1, 32], strides = [1, 1]} : vector<1x96xf32> to vector<1x32xf32>
    %82 = vector.extract_strided_slice %11 {offsets = [0, 0], sizes = [1, 32], strides = [1, 1]} : vector<1x96xf32> to vector<1x32xf32>
    %cst_28 = arith.constant dense<0.000000e+00> : vector<8xf32>
    %83 = vector.multi_reduction <add>, %80, %cst_28 [1] : vector<8x32xf32> to vector<8xf32>
    %84 = vector.shape_cast %83 : vector<8xf32> to vector<8x1xf32>
    %cst_29 = arith.constant 3.200000e+01 : f32
    %85 = vector.broadcast %cst_29 : f32 to vector<8x1xf32>
    %86 = arith.divf %84, %85 : vector<8x1xf32>
    %87 = vector.broadcast %86 : vector<8x1xf32> to vector<8x32xf32>
    %88 = arith.subf %80, %87 : vector<8x32xf32>
    %89 = arith.mulf %88, %88 : vector<8x32xf32>
    %cst_30 = arith.constant dense<0.000000e+00> : vector<8xf32>
    %90 = vector.multi_reduction <add>, %89, %cst_30 [1] : vector<8x32xf32> to vector<8xf32>
    %91 = vector.shape_cast %90 : vector<8xf32> to vector<8x1xf32>
    %cst_31 = arith.constant 3.200000e+01 : f32
    %92 = vector.broadcast %cst_31 : f32 to vector<8x1xf32>
    %93 = arith.divf %91, %92 : vector<8x1xf32>
    %94 = vector.broadcast %86 : vector<8x1xf32> to vector<8x32xf32>
    %95 = arith.subf %80, %94 : vector<8x32xf32>
    %cst_32 = arith.constant 9.99999974E-6 : f32
    %96 = vector.broadcast %cst_32 : f32 to vector<8x1xf32>
    %97 = arith.addf %93, %96 : vector<8x1xf32>
    %98 = math.rsqrt %97 : vector<8x1xf32>
    %99 = vector.broadcast %98 : vector<8x1xf32> to vector<8x32xf32>
    %100 = arith.mulf %95, %99 : vector<8x32xf32>
    %101 = vector.broadcast %81 : vector<1x32xf32> to vector<8x32xf32>
    %102 = arith.mulf %100, %101 : vector<8x32xf32>
    %103 = vector.broadcast %82 : vector<1x32xf32> to vector<8x32xf32>
    %104 = arith.addf %102, %103 : vector<8x32xf32>
    %cst_33 = arith.constant 0.000000e+00 : f32
    %105 = vector.broadcast %cst_33 : f32 to vector<8x32xf32>
    %106 = arith.maximumf %104, %105 : vector<8x32xf32>
    %107 = vector.extract_strided_slice %79 {offsets = [0, 32], sizes = [8, 32], strides = [1, 1]} : vector<8x96xf32> to vector<8x32xf32>
    %108 = vector.extract_strided_slice %10 {offsets = [0, 32], sizes = [1, 32], strides = [1, 1]} : vector<1x96xf32> to vector<1x32xf32>
    %109 = vector.extract_strided_slice %11 {offsets = [0, 32], sizes = [1, 32], strides = [1, 1]} : vector<1x96xf32> to vector<1x32xf32>
    %cst_34 = arith.constant dense<0.000000e+00> : vector<8xf32>
    %110 = vector.multi_reduction <add>, %107, %cst_34 [1] : vector<8x32xf32> to vector<8xf32>
    %111 = vector.shape_cast %110 : vector<8xf32> to vector<8x1xf32>
    %cst_35 = arith.constant 3.200000e+01 : f32
    %112 = vector.broadcast %cst_35 : f32 to vector<8x1xf32>
    %113 = arith.divf %111, %112 : vector<8x1xf32>
    %114 = vector.broadcast %113 : vector<8x1xf32> to vector<8x32xf32>
    %115 = arith.subf %107, %114 : vector<8x32xf32>
    %116 = arith.mulf %115, %115 : vector<8x32xf32>
    %cst_36 = arith.constant dense<0.000000e+00> : vector<8xf32>
    %117 = vector.multi_reduction <add>, %116, %cst_36 [1] : vector<8x32xf32> to vector<8xf32>
    %118 = vector.shape_cast %117 : vector<8xf32> to vector<8x1xf32>
    %cst_37 = arith.constant 3.200000e+01 : f32
    %119 = vector.broadcast %cst_37 : f32 to vector<8x1xf32>
    %120 = arith.divf %118, %119 : vector<8x1xf32>
    %121 = vector.broadcast %113 : vector<8x1xf32> to vector<8x32xf32>
    %122 = arith.subf %107, %121 : vector<8x32xf32>
    %cst_38 = arith.constant 9.99999974E-6 : f32
    %123 = vector.broadcast %cst_38 : f32 to vector<8x1xf32>
    %124 = arith.addf %120, %123 : vector<8x1xf32>
    %125 = math.rsqrt %124 : vector<8x1xf32>
    %126 = vector.broadcast %125 : vector<8x1xf32> to vector<8x32xf32>
    %127 = arith.mulf %122, %126 : vector<8x32xf32>
    %128 = vector.broadcast %108 : vector<1x32xf32> to vector<8x32xf32>
    %129 = arith.mulf %127, %128 : vector<8x32xf32>
    %130 = vector.broadcast %109 : vector<1x32xf32> to vector<8x32xf32>
    %131 = arith.addf %129, %130 : vector<8x32xf32>
    %cst_39 = arith.constant 0.000000e+00 : f32
    %132 = vector.broadcast %cst_39 : f32 to vector<8x32xf32>
    %133 = arith.maximumf %131, %132 : vector<8x32xf32>
    %134 = vector.extract_strided_slice %79 {offsets = [0, 64], sizes = [8, 32], strides = [1, 1]} : vector<8x96xf32> to vector<8x32xf32>
    %135 = vector.extract_strided_slice %10 {offsets = [0, 64], sizes = [1, 32], strides = [1, 1]} : vector<1x96xf32> to vector<1x32xf32>
    %136 = vector.extract_strided_slice %11 {offsets = [0, 64], sizes = [1, 32], strides = [1, 1]} : vector<1x96xf32> to vector<1x32xf32>
    %cst_40 = arith.constant dense<0.000000e+00> : vector<8xf32>
    %137 = vector.multi_reduction <add>, %134, %cst_40 [1] : vector<8x32xf32> to vector<8xf32>
    %138 = vector.shape_cast %137 : vector<8xf32> to vector<8x1xf32>
    %cst_41 = arith.constant 3.200000e+01 : f32
    %139 = vector.broadcast %cst_41 : f32 to vector<8x1xf32>
    %140 = arith.divf %138, %139 : vector<8x1xf32>
    %141 = vector.broadcast %140 : vector<8x1xf32> to vector<8x32xf32>
    %142 = arith.subf %134, %141 : vector<8x32xf32>
    %143 = arith.mulf %142, %142 : vector<8x32xf32>
    %cst_42 = arith.constant dense<0.000000e+00> : vector<8xf32>
    %144 = vector.multi_reduction <add>, %143, %cst_42 [1] : vector<8x32xf32> to vector<8xf32>
    %145 = vector.shape_cast %144 : vector<8xf32> to vector<8x1xf32>
    %cst_43 = arith.constant 3.200000e+01 : f32
    %146 = vector.broadcast %cst_43 : f32 to vector<8x1xf32>
    %147 = arith.divf %145, %146 : vector<8x1xf32>
    %148 = vector.broadcast %140 : vector<8x1xf32> to vector<8x32xf32>
    %149 = arith.subf %134, %148 : vector<8x32xf32>
    %cst_44 = arith.constant 9.99999974E-6 : f32
    %150 = vector.broadcast %cst_44 : f32 to vector<8x1xf32>
    %151 = arith.addf %147, %150 : vector<8x1xf32>
    %152 = math.rsqrt %151 : vector<8x1xf32>
    %153 = vector.broadcast %152 : vector<8x1xf32> to vector<8x32xf32>
    %154 = arith.mulf %149, %153 : vector<8x32xf32>
    %155 = vector.broadcast %135 : vector<1x32xf32> to vector<8x32xf32>
    %156 = arith.mulf %154, %155 : vector<8x32xf32>
    %157 = vector.broadcast %136 : vector<1x32xf32> to vector<8x32xf32>
    %158 = arith.addf %156, %157 : vector<8x32xf32>
    %cst_45 = arith.constant 0.000000e+00 : f32
    %159 = vector.broadcast %cst_45 : f32 to vector<8x32xf32>
    %160 = arith.maximumf %158, %159 : vector<8x32xf32>
    %161 = tpu.concatenate %106, %133, %160 in 1 : vector<8x32xf32>, vector<8x32xf32>, vector<8x32xf32> -> vector<8x96xf32>
    %162 = arith.truncf %161 : vector<8x96xf32> to vector<8x96xbf16>
    %c0_46 = arith.constant 0 : index
    %c0_47 = arith.constant 0 : index
    %163 = vector.load %arg6[%c0_46, %c0_47] : memref<96x128xbf16, #tpu.memory_space<vmem>>, vector<96x128xbf16>
    %cst_48 = arith.constant dense<0.000000e+00> : vector<8x128xf32>
    %164 = tpu.matmul %162, %163, %cst_48 {dimension_numbers = #tpu.dot_dimension_numbers<[1], [0], [0], [1], [0, 0, 1, 1], [], []>} : vector<8x96xbf16>, vector<96x128xbf16>, vector<8x128xf32> -> vector<8x128xf32>
    %c0_49 = arith.constant 0 : index
    %c0_50 = arith.constant 0 : index
    %165 = vector.load %arg9[%c0_49, %c0_50] : memref<1x128xf32, #tpu.memory_space<vmem>>, vector<1x128xf32>
    %166 = vector.broadcast %165 : vector<1x128xf32> to vector<8x128xf32>
    %167 = arith.addf %164, %166 : vector<8x128xf32>
    %c0_51 = arith.constant 0 : index
    %c0_52 = arith.constant 0 : index
    %168 = vector.load %arg10[%c0_51, %c0_52] : memref<8x128xf32, #tpu.memory_space<vmem>>, vector<8x128xf32>
    tpu.vector_store %arg10[%c0_51, %c0_52], %167 {strides = array<i32>} : memref<8x128xf32, #tpu.memory_space<vmem>>, vector<8x128xf32>,
    return
  }
  func.func @transform_0(%arg0: i32) -> (i32, i32) {
    %c0_i32 = arith.constant 0 : i32
    %c0_i32_0 = arith.constant 0 : i32
    return %arg0, %c0_i32 : i32, i32
  }
  func.func @transform_1(%arg0: i32) -> (i32, i32) {
    %c0_i32 = arith.constant 0 : i32
    %c0_i32_0 = arith.constant 0 : i32
    %c0_i32_1 = arith.constant 0 : i32
    return %c0_i32, %c0_i32_0 : i32, i32
  }
  func.func @transform_2(%arg0: i32) -> (i32, i32) {
    %c0_i32 = arith.constant 0 : i32
    %c0_i32_0 = arith.constant 0 : i32
    %c0_i32_1 = arith.constant 0 : i32
    return %c0_i32, %c0_i32_0 : i32, i32
  }
  func.func @transform_3(%arg0: i32) -> (i32, i32) {
    %c0_i32 = arith.constant 0 : i32
    %c0_i32_0 = arith.constant 0 : i32
    %c0_i32_1 = arith.constant 0 : i32
    return %c0_i32, %c0_i32_0 : i32, i32
  }
  func.func @transform_4(%arg0: i32) -> (i32, i32) {
    %c0_i32 = arith.constant 0 : i32
    %c0_i32_0 = arith.constant 0 : i32
    %c0_i32_1 = arith.constant 0 : i32
    return %c0_i32, %c0_i32_0 : i32, i32
  }
  func.func @transform_5(%arg0: i32) -> (i32, i32) {
    %c0_i32 = arith.constant 0 : i32
    %c0_i32_0 = arith.constant 0 : i32
    %c0_i32_1 = arith.constant 0 : i32
    return %c0_i32, %c0_i32_0 : i32, i32
  }
  func.func @transform_6(%arg0: i32) -> (i32, i32) {
    %c0_i32 = arith.constant 0 : i32
    %c0_i32_0 = arith.constant 0 : i32
    %c0_i32_1 = arith.constant 0 : i32
    return %c0_i32, %c0_i32_0 : i32, i32
  }
  func.func @transform_7(%arg0: i32) -> (i32, i32) {
    %c0_i32 = arith.constant 0 : i32
    %c0_i32_0 = arith.constant 0 : i32
    %c0_i32_1 = arith.constant 0 : i32
    return %c0_i32, %c0_i32_0 : i32, i32
  }
  func.func @transform_8(%arg0: i32) -> (i32, i32) {
    %c0_i32 = arith.constant 0 : i32
    %c0_i32_0 = arith.constant 0 : i32
    %c0_i32_1 = arith.constant 0 : i32
    return %c0_i32, %c0_i32_0 : i32, i32
  }
  func.func @transform_9(%arg0: i32) -> (i32, i32) {
    %c0_i32 = arith.constant 0 : i32
    %c0_i32_0 = arith.constant 0 : i32
    return %arg0, %c0_i32 : i32, i32
  }
}

</mosaic_0001>

<llo_original>
// kernel: graph_edge_action_mlp.1
$region0: #{graph_edge_action_mlp.1}
  #allocation0 [shape = 'u32[]', space=smem, size = 0x4, offset = 0x4, fixed_abs, tag = 'smem constant byte address 0x4 - core index']
  #allocation1 [shape = 'u32[72,128]{1,0:T(1,128)}', space=vmem, size = 0x9000, scoped, tag = 'internal scratch']
  %s0 = inlined_call_operand.vmem [shape: bf16[8,16], index: 0, kind: input, shape index: {}]
  %s1 = inlined_call_operand.vmem [shape: bf16[16,32], index: 1, kind: input, shape index: {}]
  %s2 = inlined_call_operand.hbm [shape: bf16[32,32], index: 2, kind: input, shape index: {}]
  %s3 = inlined_call_operand.hbm [shape: bf16[32,32], index: 3, kind: input, shape index: {}]
  %s4 = inlined_call_operand.hbm [shape: bf16[32,96], index: 4, kind: input, shape index: {}]
  %s5 = inlined_call_operand.hbm [shape: bf16[96,128], index: 5, kind: input, shape index: {}]
  %s6 = inlined_call_operand.hbm [shape: f32[8,32], index: 6, kind: input, shape index: {}]
  %s7 = inlined_call_operand.vmem [shape: f32[4,96], index: 7, kind: input, shape index: {}]
  %s8 = inlined_call_operand.vmem [shape: f32[1,128], index: 8, kind: input, shape index: {}]
  %s9 = inlined_call_operand.vmem [shape: f32[8,128], index: 9, kind: output, shape index: {}]
  %s10 = sld [smem:[#allocation0]]
  $region66: #{graph_edge_action_mlp.1} parent=0
    _
  %s12 = ssub.s32 1, %s10
  %s13 = scalar_select 0, %s12, %s10
  $region1: #{graph_edge_action_mlp.1} parent=0
    #allocation2 [shape = 'u8[8192]{0}', space=vmem, size = 0x2000, scoped, tag = 'input window, operand 2, single buffered']
    #allocation3 [shape = 's32[1]{0}', space=sflag, size = 0x4, scoped, tag = 'scoped memory for graph_edge_action_mlp.1']
    #allocation4 [shape = 'u8[8192]{0}', space=vmem, size = 0x2000, scoped, tag = 'input window, operand 3, single buffered']
    #allocation5 [shape = 's32[1]{0}', space=sflag, size = 0x4, scoped, tag = 'scoped memory for graph_edge_action_mlp.1']
    #allocation6 [shape = 'u8[8192]{0}', space=vmem, size = 0x2000, scoped, tag = 'input window, operand 4, single buffered']
    #allocation7 [shape = 'u8[24576]{0}', space=vmem, size = 0x6000, scoped, tag = 'input window, operand 5, single buffered']
    #allocation8 [shape = 's32[1]{0}', space=sflag, size = 0x4, scoped, tag = 'scoped memory for graph_edge_action_mlp.1']
    #allocation9 [shape = 'u8[4096]{0}', space=vmem, size = 0x1000, scoped, tag = 'input window, operand 6, single buffered']
    %14 = vsyncpa [#allocation3], 0
    %15 = vsyncpa [#allocation5], 0
    %16 = vsyncpa [#allocation8], 0
    // Predicated region
    $region2: #{graph_edge_action_mlp.1} parent=1 // pred_check
      _
    $region3: #{graph_edge_action_mlp.1} parent=1 // pred_check_branch
      %18 = sbr.rel (0) target = $region5
    $region4: #{graph_edge_action_mlp.1} parent=1 // pred_region
      _
    $region5: #{graph_edge_action_mlp.1} parent=1 // pred_fallthru
      _
    // Predicated region
    $region6: #{graph_edge_action_mlp.1} parent=1 // pred_check
      _
    $region7: #{graph_edge_action_mlp.1} parent=1 // pred_check_branch
      %20 = sbr.rel (0) target = $region9
    $region8: #{graph_edge_action_mlp.1} parent=1 // pred_region
      _
    $region9: #{graph_edge_action_mlp.1} parent=1 // pred_fallthru
      _
    // Predicated region
    $region10: #{graph_edge_action_mlp.1} parent=1 // pred_check
      _
    $region11: #{graph_edge_action_mlp.1} parent=1 // pred_check_branch
      %22 = sbr.rel (0) target = $region13
    $region12: #{graph_edge_action_mlp.1} parent=1 // pred_region
      %24 = vsyncadd [#allocation3], 0
      %s25 = sshll.u32 %s2, 4
      %s26 = int_to_ptr.hbm [resolvable:$true] %s25
      %s27 = sshll.u32 [#allocation2], 4
      %s28 = int_to_ptr.vmem [resolvable:$true] %s27
      %33 = dma.hbm_to_vmem [thread:$0]  %s26, 256, %s28, [#allocation3], 64, 64, 4
    $region13: #{graph_edge_action_mlp.1} parent=1 // pred_fallthru
      _
    // Predicated region
    $region14: #{graph_edge_action_mlp.1} parent=1 // pred_check
      _
    $region15: #{graph_edge_action_mlp.1} parent=1 // pred_check_branch
      %35 = sbr.rel (0) target = $region17
    $region16: #{graph_edge_action_mlp.1} parent=1 // pred_region
      %37 = vsyncadd [#allocation5], 0
      %s38 = sshll.u32 %s3, 4
      %s39 = int_to_ptr.hbm [resolvable:$true] %s38
      %s40 = sshll.u32 [#allocation4], 4
      %s41 = int_to_ptr.vmem [resolvable:$true] %s40
      %46 = dma.hbm_to_vmem [thread:$0]  %s39, 256, %s41, [#allocation5], 64, 64, 4
    $region17: #{graph_edge_action_mlp.1} parent=1 // pred_fallthru
      _
    // Predicated region
    $region18: #{graph_edge_action_mlp.1} parent=1 // pred_check
      _
    $region19: #{graph_edge_action_mlp.1} parent=1 // pred_check_branch
      %48 = sbr.rel (0) target = $region21
    $region20: #{graph_edge_action_mlp.1} parent=1 // pred_region
      %50 = vsyncadd [#allocation5], 0
      %s51 = sshll.u32 %s4, 4
      %s52 = int_to_ptr.hbm [resolvable:$true] %s51
      %s53 = sshll.u32 [#allocation6], 4
      %s54 = int_to_ptr.vmem [resolvable:$true] %s53
      %59 = dma.hbm_to_vmem [thread:$0]  %s52, 256, %s54, [#allocation5], 64, 64, 4
    $region21: #{graph_edge_action_mlp.1} parent=1 // pred_fallthru
      _
    // Predicated region
    $region22: #{graph_edge_action_mlp.1} parent=1 // pred_check
      _
    $region23: #{graph_edge_action_mlp.1} parent=1 // pred_check_branch
      %61 = sbr.rel (0) target = $region25
    $region24: #{graph_edge_action_mlp.1} parent=1 // pred_region
      %63 = vsyncadd [#allocation8], 0
      %s64 = sshll.u32 %s5, 4
      %s65 = int_to_ptr.hbm [resolvable:$true] %s64
      %s66 = sshll.u32 [#allocation7], 4
      %s67 = int_to_ptr.vmem [resolvable:$true] %s66
      %72 = dma.hbm_to_vmem [thread:$0]  %s65, 768, %s67, [#allocation8], 64, 64, 4
    $region25: #{graph_edge_action_mlp.1} parent=1 // pred_fallthru
      _
    // Predicated region
    $region26: #{graph_edge_action_mlp.1} parent=1 // pred_check
      _
    $region27: #{graph_edge_action_mlp.1} parent=1 // pred_check_branch
      %74 = sbr.rel (0) target = $region29
    $region28: #{graph_edge_action_mlp.1} parent=1 // pred_region
      %76 = vsyncadd [#allocation8], 0
      %s78 = sshll.u32 %s6, 4
      %s79 = int_to_ptr.hbm [resolvable:$true] %s78
      %s80 = sshll.u32 [#allocation9], 4
      %s81 = int_to_ptr.vmem [resolvable:$true] %s80
      %83 = dma.hbm_to_vmem [thread:$0]  %s79, 128, %s81, [#allocation8]
    $region29: #{graph_edge_action_mlp.1} parent=1 // pred_fallthru
      _
    // Predicated region
    $region30: #{graph_edge_action_mlp.1} parent=1 // pred_check
      _
    $region31: #{graph_edge_action_mlp.1} parent=1 // pred_check_branch
      %85 = sbr.rel (0) target = $region33
    $region32: #{graph_edge_action_mlp.1} parent=1 // pred_region
      _
    $region33: #{graph_edge_action_mlp.1} parent=1 // pred_fallthru
      _
    // Predicated region
    $region34: #{graph_edge_action_mlp.1} parent=1 // pred_check
      _
    $region35: #{graph_edge_action_mlp.1} parent=1 // pred_check_branch
      %87 = sbr.rel (0) target = $region37
    $region36: #{graph_edge_action_mlp.1} parent=1 // pred_region
      _
    $region37: #{graph_edge_action_mlp.1} parent=1 // pred_fallthru
      _
    // Predicated region
    $region38: #{graph_edge_action_mlp.1} parent=1 // pred_check
      _
    $region39: #{graph_edge_action_mlp.1} parent=1 // pred_check_branch
      %89 = sbr.rel (0) target = $region41
    $region40: #{graph_edge_action_mlp.1} parent=1 // pred_region
      %91 = dma.done [#allocation3], 256
    $region41: #{graph_edge_action_mlp.1} parent=1 // pred_fallthru
      _
    // Predicated region
    $region42: #{graph_edge_action_mlp.1} parent=1 // pred_check
      _
    $region43: #{graph_edge_action_mlp.1} parent=1 // pred_check_branch
      %93 = sbr.rel (0) target = $region45
    $region44: #{graph_edge_action_mlp.1} parent=1 // pred_region
      %95 = dma.done [#allocation5], 256
    $region45: #{graph_edge_action_mlp.1} parent=1 // pred_fallthru
      _
    // Predicated region
    $region46: #{graph_edge_action_mlp.1} parent=1 // pred_check
      _
    $region47: #{graph_edge_action_mlp.1} parent=1 // pred_check_branch
      %97 = sbr.rel (0) target = $region49
    $region48: #{graph_edge_action_mlp.1} parent=1 // pred_region
      %99 = dma.done [#allocation5], 256
    $region49: #{graph_edge_action_mlp.1} parent=1 // pred_fallthru
      _
    // Predicated region
    $region50: #{graph_edge_action_mlp.1} parent=1 // pred_check
      _
    $region51: #{graph_edge_action_mlp.1} parent=1 // pred_check_branch
      %101 = sbr.rel (0) target = $region53
    $region52: #{graph_edge_action_mlp.1} parent=1 // pred_region
      %103 = dma.done [#allocation8], 768
    $region53: #{graph_edge_action_mlp.1} parent=1 // pred_fallthru
      _
    // Predicated region
    $region54: #{graph_edge_action_mlp.1} parent=1 // pred_check
      _
    $region55: #{graph_edge_action_mlp.1} parent=1 // pred_check_branch
      %105 = sbr.rel (0) target = $region57
    $region56: #{graph_edge_action_mlp.1} parent=1 // pred_region
      %107 = dma.done [#allocation8], 128
    $region57: #{graph_edge_action_mlp.1} parent=1 // pred_fallthru
      _
    %v109 = vld [vmem:[#allocation9] sm:$0xff]
    %v110 = vld [vmem:[%s7] sm:$0xf]
    %v111 = vld [vmem:[%s0] sm:$0xf]
    %v112 = vld [vmem:[%s1] sm:$0xf]
    %v113 = vld [vmem:[%s1 + $0x4] sm:$0xf]
    %v114 = vperm.slane %v109, 0
    %v117 = vunpack.c.l.b16 %v112
    %v118 = vunpack.c.l.b16 %v113
    %v119 = vpack.c.b16 %v118, %v117
    %vm121 = vcmask 130048
    %v123 = vsel %vm121, %v111, 0
    %125 = vmatpush.bf16.msra.mxu0 0
    %126 = vmatpush.bf16.msra.mxu0 0
    %127 = vmatpush.bf16.msra.mxu0 0
    %128 = vmatpush.bf16.msra.mxu0 0
    %129 = vmatpush.bf16.msra.mxu0 0
    %130 = vmatpush.bf16.msra.mxu0 0
    %131 = vmatpush.bf16.msra.mxu0 0
    %132 = vmatpush.bf16.msra.mxu0 %v119
    %133 = vmatmul.bf16.gmra.mxu0 %v123
    %v134 = vpop.f32.mrf.mxu0
    %v135 = vadd.f32 %v114, %v134
    %v136 = vpop.f32.mrf.mxu0
    %137 = vdwg.mxu0
    %vm138 = vcmask 261120
    %v139 = vsel %vm138, %v135, 0.0
    %140 = vadd.xlane.f32.xlu0 %v139
    %v141 = vpop.xlane.xlu0 %140
    %v142 = vrcp.pop 32.0
    %v143 = vmul.f32 32.0, %v142
    %v144 = vsub.f32 1.0, %v143
    %v145 = vmul.f32 %v142, %v144
    %v146 = vadd.f32 %v142, %v145
    %vm147 = vweird.f32 %v142
    %v148 = vsel %vm147, %v142, %v146
    %v149 = vmul.f32 %v141, %v148
    %v150 = vsub.f32 %v135, %v149
    %v151 = vmul.f32 %v150, %v150
    %v152 = vsel %vm138, %v151, 0.0
    %153 = vadd.xlane.f32.xlu0 %v152
    %v154 = vpop.xlane.xlu0 %153
    %v155 = vmul.f32 %v154, %v148
    %v156 = vadd.f32 %v155, 1e-05
    %v157 = vrsqrt.pop %v156
    %v158 = vmul.f32 %v157, %v156
    %v159 = vmul.f32 %v158, %v157
    %v160 = vmul.f32 0.5, %v159
    %v161 = vsub.f32 1.5, %v160
    %v162 = vmul.f32 %v157, %v161
    %vm163 = vweird.f32 %v156
    %vm164 = vweird.f32 %v157
    %vm165 = vmor %vm163, %vm164
    %v166 = vsel %vm165, %v157, %v162
    %v167 = vmul.f32 %v150, %v166
    %v168 = vperm.slane %v109, 1
    %v169 = vmul.f32 %v167, %v168
    %v170 = vperm.slane %v109, 2
    %v171 = vadd.f32 %v169, %v170
    %v172 = vmax.f32 %v171, 0.0
    %v173 = vpack.c.bf16 %v172, %v172
    %v174 = vld [vmem:[#allocation2] sm:$0xf]
    %v175 = vld [vmem:[#allocation2 + $0x4] sm:$0xf]
    %v176 = vld [vmem:[#allocation2 + $0x8] sm:$0xf]
    %v177 = vld [vmem:[#allocation2 + $0xc] sm:$0xf]
    %v178 = vperm.slane %v109, 3
    %v183 = vunpack.c.l.b16 %v174
    %v184 = vunpack.c.l.b16 %v175
    %v185 = vunpack.c.l.b16 %v176
    %v186 = vunpack.c.l.b16 %v177
    %v187 = vpack.c.b16 %v184, %v183
    %v188 = vpack.c.b16 %v186, %v185
    %v192 = vsel %vm138, %v173, 0
    %194 = vmatpush.bf16.msra.mxu0 0
    %195 = vmatpush.bf16.msra.mxu0 0
    %196 = vmatpush.bf16.msra.mxu0 0
    %197 = vmatpush.bf16.msra.mxu0 0
    %198 = vmatpush.bf16.msra.mxu0 0
    %199 = vmatpush.bf16.msra.mxu0 0
    %200 = vmatpush.bf16.msra.mxu0 %v188
    %201 = vmatpush.bf16.msra.mxu0 %v187
    %202 = vmatmul.bf16.gmra.mxu0 %v192
    %v203 = vpop.f32.mrf.mxu0
    %v204 = vadd.f32 %v178, %v203
    %v205 = vpop.f32.mrf.mxu0
    %206 = vdwg.mxu0
    %v207 = vsel %vm138, %v204, 0.0
    %208 = vadd.xlane.f32.xlu0 %v207
    %v209 = vpop.xlane.xlu0 %208
    %v210 = vmul.f32 %v209, %v148
    %v211 = vsub.f32 %v204, %v210
    %v212 = vmul.f32 %v211, %v211
    %v213 = vsel %vm138, %v212, 0.0
    %214 = vadd.xlane.f32.xlu0 %v213
    %v215 = vpop.xlane.xlu0 %214
    %v216 = vmul.f32 %v215, %v148
    %v217 = vadd.f32 %v216, 1e-05
    %v218 = vrsqrt.pop %v217
    %v219 = vmul.f32 %v218, %v217
    %v220 = vmul.f32 %v219, %v218
    %v221 = vmul.f32 0.5, %v220
    %v222 = vsub.f32 1.5, %v221
    %v223 = vmul.f32 %v218, %v222
    %vm224 = vweird.f32 %v217
    %vm225 = vweird.f32 %v218
    %vm226 = vmor %vm224, %vm225
    %v227 = vsel %vm226, %v218, %v223
    %v228 = vmul.f32 %v211, %v227
    %v229 = vperm.slane %v109, 4
    %v230 = vmul.f32 %v228, %v229
    %v231 = vperm.slane %v109, 5
    %v232 = vadd.f32 %v230, %v231
    %v233 = vmax.f32 %v232, 0.0
    %v234 = vpack.c.bf16 %v233, %v233
    %v235 = vld [vmem:[#allocation4] sm:$0xf]
    %v236 = vld [vmem:[#allocation4 + $0x4] sm:$0xf]
    %v237 = vld [vmem:[#allocation4 + $0x8] sm:$0xf]
    %v238 = vld [vmem:[#allocation4 + $0xc] sm:$0xf]
    %v239 = vperm.slane %v109, 6
    %v244 = vunpack.c.l.b16 %v235
    %v245 = vunpack.c.l.b16 %v236
    %v246 = vunpack.c.l.b16 %v237
    %v247 = vunpack.c.l.b16 %v238
    %v248 = vpack.c.b16 %v245, %v244
    %v249 = vpack.c.b16 %v247, %v246
    %v253 = vsel %vm138, %v234, 0
    %255 = vmatpush.bf16.msra.mxu0 0
    %256 = vmatpush.bf16.msra.mxu0 0
    %257 = vmatpush.bf16.msra.mxu0 0
    %258 = vmatpush.bf16.msra.mxu0 0
    %259 = vmatpush.bf16.msra.mxu0 0
    %260 = vmatpush.bf16.msra.mxu0 0
    %261 = vmatpush.bf16.msra.mxu0 %v249
    %262 = vmatpush.bf16.msra.mxu0 %v248
    %263 = vmatmul.bf16.gmra.mxu0 %v253
    %v264 = vpop.f32.mrf.mxu0
    %v265 = vadd.f32 %v239, %v264
    %v266 = vpop.f32.mrf.mxu0
    %267 = vdwg.mxu0
    %v268 = vpack.c.bf16 %v265, %v265
    %v269 = vld [vmem:[#allocation6] sm:$0xf]
    %v270 = vld [vmem:[#allocation6 + $0x4] sm:$0xf]
    %v271 = vld [vmem:[#allocation6 + $0x8] sm:$0xf]
    %v272 = vld [vmem:[#allocation6 + $0xc] sm:$0xf]
    %v273 = vperm.slane %v110, 0
    %v278 = vunpack.c.l.b16 %v269
    %v279 = vunpack.c.l.b16 %v270
    %v280 = vunpack.c.l.b16 %v271
    %v281 = vunpack.c.l.b16 %v272
    %v282 = vpack.c.b16 %v279, %v278
    %v283 = vpack.c.b16 %v281, %v280
    %v287 = vsel %vm138, %v268, 0
    %289 = vmatpush.bf16.msra.mxu0 0
    %290 = vmatpush.bf16.msra.mxu0 0
    %291 = vmatpush.bf16.msra.mxu0 0
    %292 = vmatpush.bf16.msra.mxu0 0
    %293 = vmatpush.bf16.msra.mxu0 0
    %294 = vmatpush.bf16.msra.mxu0 0
    %295 = vmatpush.bf16.msra.mxu0 %v283
    %296 = vmatpush.bf16.msra.mxu0 %v282
    %297 = vmatmul.bf16.gmra.mxu0 %v287
    %v298 = vpop.f32.mrf.mxu0
    %v299 = vadd.f32 %v273, %v298
    %v300 = vpop.f32.mrf.mxu0
    %301 = vdwg.mxu0
    %v302 = vsel %vm138, %v299, 0.0
    %303 = vadd.xlane.f32.xlu0 %v302
    %v304 = vpop.xlane.xlu0 %303
    %v305 = vmul.f32 %v304, %v148
    %v306 = vsub.f32 %v299, %v305
    %v307 = vmul.f32 %v306, %v306
    %v308 = vsel %vm138, %v307, 0.0
    %309 = vadd.xlane.f32.xlu0 %v308
    %v310 = vpop.xlane.xlu0 %309
    %v311 = vmul.f32 %v310, %v148
    %v312 = vadd.f32 %v311, 1e-05
    %v313 = vrsqrt.pop %v312
    %v314 = vmul.f32 %v313, %v312
    %v315 = vmul.f32 %v314, %v313
    %v316 = vmul.f32 0.5, %v315
    %v317 = vsub.f32 1.5, %v316
    %v318 = vmul.f32 %v313, %v317
    %vm319 = vweird.f32 %v312
    %vm320 = vweird.f32 %v313
    %vm321 = vmor %vm319, %vm320
    %v322 = vsel %vm321, %v313, %v318
    %v323 = vmul.f32 %v306, %v322
    %v324 = vperm.slane %v110, 1
    %v325 = vmul.f32 %v323, %v324
    %v326 = vperm.slane %v110, 2
    %v327 = vadd.f32 %v325, %v326
    %v328 = vmax.f32 %v327, 0.0
    %330 = vrot.lane.b32.xlu0 %v299, 96
    %v331 = vpop.permute.xlu0 %330
    %v333 = vsel %vm138, %v331, 0.0
    %334 = vadd.xlane.f32.xlu0 %v333
    %v335 = vpop.xlane.xlu0 %334
    %v336 = vmul.f32 %v335, %v148
    %v337 = vsub.f32 %v299, %v336
    %v338 = vmul.f32 %v337, %v337
    %340 = vrot.lane.b32.xlu0 %v338, 96
    %v341 = vpop.permute.xlu0 %340
    %v343 = vsel %vm138, %v341, 0.0
    %344 = vadd.xlane.f32.xlu0 %v343
    %v345 = vpop.xlane.xlu0 %344
    %v346 = vmul.f32 %v345, %v148
    %v347 = vadd.f32 %v346, 1e-05
    %v348 = vrsqrt.pop %v347
    %v349 = vmul.f32 %v348, %v347
    %v350 = vmul.f32 %v349, %v348
    %v351 = vmul.f32 0.5, %v350
    %v352 = vsub.f32 1.5, %v351
    %v353 = vmul.f32 %v348, %v352
    %vm354 = vweird.f32 %v347
    %vm355 = vweird.f32 %v348
    %vm356 = vmor %vm354, %vm355
    %v357 = vsel %vm356, %v348, %v353
    %v358 = vmul.f32 %v337, %v357
    %v359 = vmul.f32 %v358, %v324
    %v360 = vadd.f32 %v359, %v326
    %v361 = vmax.f32 %v360, 0.0
    %362 = vrot.lane.b32.xlu0 %v299, 64
    %v363 = vpop.permute.xlu0 %362
    %v365 = vsel %vm138, %v363, 0.0
    %366 = vadd.xlane.f32.xlu0 %v365
    %v367 = vpop.xlane.xlu0 %366
    %v368 = vmul.f32 %v367, %v148
    %v369 = vsub.f32 %v299, %v368
    %v370 = vmul.f32 %v369, %v369
    %372 = vrot.lane.b32.xlu0 %v370, 64
    %v373 = vpop.permute.xlu0 %372
    %v375 = vsel %vm138, %v373, 0.0
    %376 = vadd.xlane.f32.xlu0 %v375
    %v377 = vpop.xlane.xlu0 %376
    %v378 = vmul.f32 %v377, %v148
    %v379 = vadd.f32 %v378, 1e-05
    %v380 = vrsqrt.pop %v379
    %v381 = vmul.f32 %v380, %v379
    %v382 = vmul.f32 %v381, %v380
    %v383 = vmul.f32 0.5, %v382
    %v384 = vsub.f32 1.5, %v383
    %v385 = vmul.f32 %v380, %v384
    %vm386 = vweird.f32 %v379
    %vm387 = vweird.f32 %v380
    %vm388 = vmor %vm386, %vm387
    %v389 = vsel %vm388, %v380, %v385
    %v390 = vmul.f32 %v369, %v389
    %v391 = vmul.f32 %v390, %v324
    %v392 = vadd.f32 %v391, %v326
    %v393 = vmax.f32 %v392, 0.0
    %v394 = vsel %vm138, %v328, %v361
    %vm395 = vcmask 523264
    %v396 = vsel %vm395, %v394, %v393
    %v397 = vpack.c.bf16 %v396, %v396
    %v398 = vld [vmem:[#allocation7] sm:$0xf]
    %v399 = vld [vmem:[#allocation7 + $0x4] sm:$0xf]
    %v400 = vld [vmem:[#allocation7 + $0x8] sm:$0xf]
    %v401 = vld [vmem:[#allocation7 + $0xc] sm:$0xf]
    %v402 = vld [vmem:[#allocation7 + $0x10] sm:$0xf]
    %v403 = vld [vmem:[#allocation7 + $0x14] sm:$0xf]
    %v404 = vld [vmem:[#allocation7 + $0x18] sm:$0xf]
    %v405 = vld [vmem:[#allocation7 + $0x1c] sm:$0xf]
    %v406 = vld [vmem:[#allocation7 + $0x20] sm:$0xf]
    %v407 = vld [vmem:[#allocation7 + $0x24] sm:$0xf]
    %v408 = vld [vmem:[#allocation7 + $0x28] sm:$0xf]
    %v409 = vld [vmem:[#allocation7 + $0x2c] sm:$0xf]
    %v410 = vld [vmem:[%s8] sm:$0x1]
    %v412 = vperm.slane %v410, 0
    %v426 = vunpack.c.l.b16 %v398
    %v427 = vunpack.c.l.b16 %v399
    %v428 = vunpack.c.l.b16 %v400
    %v429 = vunpack.c.l.b16 %v401
    %v430 = vunpack.c.l.b16 %v402
    %v431 = vunpack.c.l.b16 %v403
    %v432 = vunpack.c.l.b16 %v404
    %v433 = vunpack.c.l.b16 %v405
    %v434 = vunpack.c.l.b16 %v406
    %v435 = vunpack.c.l.b16 %v407
    %v436 = vunpack.c.l.b16 %v408
    %v437 = vunpack.c.l.b16 %v409
    %v438 = vpack.c.b16 %v427, %v426
    %v439 = vpack.c.b16 %v429, %v428
    %v440 = vpack.c.b16 %v431, %v430
    %v441 = vpack.c.b16 %v433, %v432
    %v442 = vpack.c.b16 %v435, %v434
    %v443 = vpack.c.b16 %v437, %v436
    %vm450 = vcmask 785408
    %v452 = vsel %vm450, %v397, 0
    %454 = vmatpush.bf16.msra.mxu0 0
    %455 = vmatpush.bf16.msra.mxu0 0
    %456 = vmatpush.bf16.msra.mxu0 %v443
    %457 = vmatpush.bf16.msra.mxu0 %v442
    %458 = vmatpush.bf16.msra.mxu0 %v441
    %459 = vmatpush.bf16.msra.mxu0 %v440
    %460 = vmatpush.bf16.msra.mxu0 %v439
    %461 = vmatpush.bf16.msra.mxu0 %v438
    %462 = vmatmul.bf16.gmra.mxu0 %v452
    %v463 = vpop.f32.mrf.mxu0
    %v464 = vadd.f32 %v412, %v463
    %v465 = vpop.f32.mrf.mxu0
    %466 = vdwg.mxu0
    %467 = vst [vmem:[%s9] sm:$0xff] %v464
    // Predicated region
    $region58: #{graph_edge_action_mlp.1} parent=1 // pred_check
      _
    $region59: #{graph_edge_action_mlp.1} parent=1 // pred_check_branch
      %469 = sbr.rel (0) target = $region61
    $region60: #{graph_edge_action_mlp.1} parent=1 // pred_region
      _
    $region61: #{graph_edge_action_mlp.1} parent=1 // pred_fallthru
      _
    // Predicated region
    $region62: #{graph_edge_action_mlp.1} parent=1 // pred_check
      _
    $region63: #{graph_edge_action_mlp.1} parent=1 // pred_check_branch
      %471 = sbr.rel (0) target = $region65
    $region64: #{graph_edge_action_mlp.1} parent=1 // pred_region
      _
    $region65: #{graph_edge_action_mlp.1} parent=1 // pred_fallthru
      _
    %472 = vsyncpa [#allocation3], 1
    %473 = vsyncpa [#allocation5], 1
    %474 = vsyncpa [#allocation8], 1

</llo_original>
